<compile_context>
chip_gen: v5e
topology: v5e:2x2
jax: 0.10.0
libtpu: 0.0.40
codegen_flags: <defaults>
</compile_context>

<pallas_src>
import jax
import jax.numpy as jnp
from jax.experimental import pallas as pl
from jax.experimental.pallas import tpu as pltpu


_LANE = 128
_MAX_BATCH_BLOCK = 16   # trace-time unroll bound for the per-batch matmul loop


def _style_residual_kernel(w_ref, b_ref, x_ref, s_ref, o_ref):
    # w_ref: (C, S)   b_ref: (C, 1)
    # x_ref/o_ref: (Bb, C, tT)   s_ref: (Bb, S, tT)
    w = w_ref[...]
    bias = b_ref[...]                       # (C, 1) broadcasts over (C, tT)
    for i in range(x_ref.shape[0]):         # Bb is small & static -> unrolled
        conv = jnp.dot(w, s_ref[i], preferred_element_type=jnp.float32)
        o_ref[i] = (x_ref[i].astype(jnp.float32) + conv + bias).astype(o_ref.dtype)


def _tpu_vmem_bytes():
    try:
        return int(pltpu.get_tpu_info().vmem_capacity_bytes)
    except Exception:
        return 64 * 1024 * 1024  # conservative fallback = v7x per-core VMEM


def _choose_block(B, C, S, T, dtype_bytes):
    """Pick (Bb, tT) so each grid step streams multi-MB from HBM while the
    double-buffered streams + f32 intermediates fit a VMEM budget, and the
    grid has >= 2 steps (v7x megacore)."""
    vmem = _tpu_vmem_bytes()
    if vmem >= 96 * 1024 * 1024:      # v5e / v6e: 128 MiB physical VMEM
        budget = 28 * 1024 * 1024
        target_stream = 4 * 1024 * 1024
    else:                             # v7x: 64 MiB physical VMEM, 3.2 TB/s HBM
        budget = 20 * 1024 * 1024
        target_stream = 6 * 1024 * 1024

    stream_unit = (2 * C + S) * dtype_bytes                # HBM bytes / element
    f32_extra = C * 4 + (C * 4 if dtype_bytes < 4 else 0)  # dot result (+ x cast)
    vmem_unit = 2 * stream_unit + f32_extra                # VMEM bytes / element

    elems = max(_LANE,
                min(budget // max(vmem_unit, 1),
                    max(target_stream // max(stream_unit, 1), _LANE)))

    # Prefer long, lane-dense time tiles; fold batches on top if T is short.
    if T <= _LANE or elems >= T:
        tT = T
    else:
        tT = max(_LANE, (elems // _LANE) * _LANE)
    Bb = max(1, min(B, elems // tT, _MAX_BATCH_BLOCK))

    # Guarantee >= 2 grid steps so both TensorCores get work.
    while pl.cdiv(B, Bb) * pl.cdiv(T, tT) < 2:
        if Bb > 1:
            Bb = max(1, Bb // 2)
        elif tT > _LANE:
            new_tT = max(_LANE, ((tT // 2) // _LANE) * _LANE)
            if new_tT == tT:
                break
            tT = new_tT
        else:
            break

    return Bb, tT, stream_unit, f32_extra, vmem


def style_residual(x, s, weight, bias):
    """x: [B, C, T], s: [B, S, T], weight: [C, S, 1], bias: [C] -> [B, C, T]."""
    B, C, T = x.shape
    _, S, _ = s.shape
    assert weight.shape == (C, S, 1), "only kernel_size=1 implemented in-kernel"
    # TODO(synk): kernel_size > 1 (padded temporal taps) not implemented; k=1 only.

    w2d = weight[:, :, 0]                            # (C, S), VMEM-resident
    b2d = bias.reshape(C, 1).astype(jnp.float32)     # (C, 1), VMEM-resident
    dtype_bytes = jnp.dtype(x.dtype).itemsize

    Bb, tT, stream_unit, f32_extra, vmem_phys = _choose_block(B, C, S, T, dtype_bytes)

    # vmem_limit from the actual working set (double-buffered streams + f32
    # intermediates + resident weight/bias), 1.5x + 4 MiB headroom, capped at
    # 3/4 of physical VMEM (v7x only has 64 MiB).
    block_elems = Bb * tT
    footprint = (2 * block_elems * stream_unit
                 + block_elems * f32_extra
                 + (C * S + C) * 4)
    vmem_limit = footprint + footprint // 2 + (4 << 20)
    vmem_limit = min(max(vmem_limit, 16 << 20), (vmem_phys * 3) // 4)

    cost = pl.CostEstimate(
        flops=2 * B * C * S * T,
        transcendentals=0,
        bytes_accessed=(2 * C + S) * B * T * dtype_bytes + (C * S + C) * 4,
    )

    return pl.pallas_call(
        _style_residual_kernel,
        out_shape=jax.ShapeDtypeStruct((B, C, T), x.dtype),
        grid_spec=pltpu.PrefetchScalarGridSpec(
            num_scalar_prefetch=0,
            grid=(pl.cdiv(B, Bb), pl.cdiv(T, tT)),
            in_specs=[
                pl.BlockSpec((C, S), lambda b, t: (0, 0)),           # weight (resident)
                pl.BlockSpec((C, 1), lambda b, t: (0, 0)),           # bias   (resident)
                pl.BlockSpec((Bb, C, tT), lambda b, t: (b, 0, t)),   # x tile
                pl.BlockSpec((Bb, S, tT), lambda b, t: (b, 0, t)),   # s tile
            ],
            out_specs=pl.BlockSpec((Bb, C, tT), lambda b, t: (b, 0, t)),
        ),
        compiler_params=pltpu.CompilerParams(
            dimension_semantics=("parallel", "parallel"),
            vmem_limit_bytes=int(vmem_limit)),
        cost_estimate=cost,
    )(w2d, b2d, x, s)


def _reference(x, s, weight, bias):
    w = weight[:, :, 0].astype(jnp.float32)
    conv = jnp.einsum("cs,bst->bct", w, s.astype(jnp.float32))
    return x.astype(jnp.float32) + conv + bias.astype(jnp.float32)[None, :, None]


if __name__ == "__main__":
    key = jax.random.PRNGKey(0)

    def _check(B, C, S, T, dtype, key, atol, rtol):
        k_x, k_s, k_w, k_b, key = jax.random.split(key, 5)
        x = jax.random.normal(k_x, (B, C, T), dtype=jnp.float32).astype(dtype)
        s = jax.random.normal(k_s, (B, S, T), dtype=jnp.float32).astype(dtype)
        w = (jax.random.normal(k_w, (C, S, 1), dtype=jnp.float32) * 0.1).astype(dtype)
        b = (jax.random.normal(k_b, (C,), dtype=jnp.float32) * 0.1).astype(dtype)
        out = jax.block_until_ready(style_residual(x, s, w, b))
        ref = _reference(x, s, w, b)
        assert out.shape == (B, C, T)
        assert out.dtype == x.dtype
        assert jnp.allclose(out.astype(jnp.float32), ref, atol=atol, rtol=rtol), \
            f"mismatch for B={B} C={C} S={S} T={T} dtype={dtype}"
        return key

    # 1) Toy StyleResidual sizes: small C/S, short T (grid splits on batch).
    key = _check(2, 4, 6, 16, jnp.float32, key, 1e-5, 1e-5)
    # 2) Wider channels / longer T (full-T lane tile).
    key = _check(2, 16, 8, 256, jnp.float32, key, 1e-5, 1e-5)
    # 3) bf16 I/O, T not a multiple of 128 (full-T block, f32 accumulation).
    key = _check(3, 24, 12, 300, jnp.bfloat16, key, 5e-2, 5e-2)
    # 4) Uneven batch blocking: B=5 folds to Bb=2 -> partial last batch block.
    key = _check(5, 16, 8, 2048, jnp.float32, key, 1e-5, 1e-5)

    print("KERNEL_OK")
</pallas_src>

<mosaic_0001>
module attributes {stable_mosaic.version = 11 : i64} {
  func.func @_style_residual_kernel(%arg0: i32, %arg1: i32, %arg2: memref<4x6xf32, #tpu.memory_space<vmem>>, %arg3: memref<4x1xf32, #tpu.memory_space<vmem>>, %arg4: memref<1x4x16xf32, #tpu.memory_space<vmem>>, %arg5: memref<1x6x16xf32, #tpu.memory_space<vmem>>, %arg6: memref<1x4x16xf32, #tpu.memory_space<vmem>>) attributes {dimension_semantics = [#tpu.dimension_semantics<parallel>, #tpu.dimension_semantics<parallel>], iteration_bounds = array<i64: 2, 1>, scalar_prefetch = 0 : i64, scratch_operands = 0 : i64, tpu.core_type = #tpu.core_type<tc>, window_params = [{pipeline_mode = #tpu.pipeline_mode<synchronous>, transform_indices = @transform_0, window_bounds = array<i64: 4, 6>}, {pipeline_mode = #tpu.pipeline_mode<synchronous>, transform_indices = @transform_1, window_bounds = array<i64: 4, 1>}, {transform_indices = @transform_2, window_bounds = array<i64: 1, 4, 16>}, {transform_indices = @transform_3, window_bounds = array<i64: 1, 6, 16>}, {transform_indices = @transform_4, window_bounds = array<i64: 1, 4, 16>}]} {
    %c0 = arith.constant 0 : index
    %c0_0 = arith.constant 0 : index
    %0 = vector.load %arg2[%c0, %c0_0] : memref<4x6xf32, #tpu.memory_space<vmem>>, vector<4x6xf32>
    %c0_1 = arith.constant 0 : index
    %c0_2 = arith.constant 0 : index
    %1 = vector.load %arg3[%c0_1, %c0_2] : memref<4x1xf32, #tpu.memory_space<vmem>>, vector<4x1xf32>
    %c0_3 = arith.constant 0 : index
    %c0_4 = arith.constant 0 : index
    %c0_5 = arith.constant 0 : index
    %2 = vector.load %arg5[%c0_3, %c0_4, %c0_5] : memref<1x6x16xf32, #tpu.memory_space<vmem>>, vector<1x6x16xf32>
    %3 = vector.shape_cast %2 : vector<1x6x16xf32> to vector<6x16xf32>
    %cst = arith.constant dense<0.000000e+00> : vector<4x16xf32>
    %4 = tpu.matmul %0, %3, %cst {dimension_numbers = #tpu.dot_dimension_numbers<[1], [0], [0], [1], [0, 0, 1, 1], [], []>} : vector<4x6xf32>, vector<6x16xf32>, vector<4x16xf32> -> vector<4x16xf32>
    %c0_6 = arith.constant 0 : index
    %c0_7 = arith.constant 0 : index
    %c0_8 = arith.constant 0 : index
    %5 = vector.load %arg4[%c0_6, %c0_7, %c0_8] : memref<1x4x16xf32, #tpu.memory_space<vmem>>, vector<1x4x16xf32>
    %6 = vector.shape_cast %5 : vector<1x4x16xf32> to vector<4x16xf32>
    %7 = arith.addf %6, %4 : vector<4x16xf32>
    %8 = vector.broadcast %1 : vector<4x1xf32> to vector<4x16xf32>
    %9 = arith.addf %7, %8 : vector<4x16xf32>
    %c0_9 = arith.constant 0 : index
    %c0_10 = arith.constant 0 : index
    %c0_11 = arith.constant 0 : index
    %10 = vector.load %arg6[%c0_9, %c0_10, %c0_11] : memref<1x4x16xf32, #tpu.memory_space<vmem>>, vector<1x4x16xf32>
    %11 = vector.shape_cast %10 : vector<1x4x16xf32> to vector<4x16xf32>
    %12 = vector.shape_cast %9 : vector<4x16xf32> to vector<1x4x16xf32>
    tpu.vector_store %arg6[%c0_9, %c0_10, %c0_11], %12 {strides = array<i32>} : memref<1x4x16xf32, #tpu.memory_space<vmem>>, vector<1x4x16xf32>,
    return
  }
  func.func @transform_0(%arg0: i32, %arg1: i32) -> (i32, i32) {
    %c0_i32 = arith.constant 0 : i32
    %c0_i32_0 = arith.constant 0 : i32
    %c0_i32_1 = arith.constant 0 : i32
    return %c0_i32, %c0_i32_0 : i32, i32
  }
  func.func @transform_1(%arg0: i32, %arg1: i32) -> (i32, i32) {
    %c0_i32 = arith.constant 0 : i32
    %c0_i32_0 = arith.constant 0 : i32
    %c0_i32_1 = arith.constant 0 : i32
    return %c0_i32, %c0_i32_0 : i32, i32
  }
  func.func @transform_2(%arg0: i32, %arg1: i32) -> (i32, i32, i32) {
    %c0_i32 = arith.constant 0 : i32
    %c0_i32_0 = arith.constant 0 : i32
    return %arg0, %c0_i32, %arg1 : i32, i32, i32
  }
  func.func @transform_3(%arg0: i32, %arg1: i32) -> (i32, i32, i32) {
    %c0_i32 = arith.constant 0 : i32
    %c0_i32_0 = arith.constant 0 : i32
    return %arg0, %c0_i32, %arg1 : i32, i32, i32
  }
  func.func @transform_4(%arg0: i32, %arg1: i32) -> (i32, i32, i32) {
    %c0_i32 = arith.constant 0 : i32
    %c0_i32_0 = arith.constant 0 : i32
    return %arg0, %c0_i32, %arg1 : i32, i32, i32
  }
}

</mosaic_0001>

<llo_original>
// kernel: tpu_custom_call.1
$region0: #{tpu_custom_call.1}
  #allocation0 [shape = 'u32[]', space=smem, size = 0x4, offset = 0x4, fixed_abs, tag = 'smem constant byte address 0x4 - core index']
  #allocation1 [shape = 'u32[72,128]{1,0:T(1,128)}', space=vmem, size = 0x9000, scoped, tag = 'internal scratch']
  %s0 = inlined_call_operand.vmem [shape: f32[4,6], index: 0, kind: input, shape index: {}]
  %s1 = inlined_call_operand.vmem [shape: f32[4,1], index: 1, kind: input, shape index: {}]
  %s2 = inlined_call_operand.vmem [shape: f32[2,4,16], index: 2, kind: input, shape index: {}]
  %s3 = inlined_call_operand.vmem [shape: f32[2,6,16], index: 3, kind: input, shape index: {}]
  %s4 = inlined_call_operand.hbm [shape: f32[2,4,16], index: 4, kind: output, shape index: {}]
  %s5 = sld [smem:[#allocation0]]
  $region49: #{tpu_custom_call.1} parent=0
    _
  %s7 = ssub.s32 1, %s5
  %s8 = scalar_select 0, %s7, %s5
  $region1: #{tpu_custom_call.1} parent=0
    #allocation2 [shape = 'u8[4096]{0}', space=vmem, size = 0x1000, scoped, tag = 'output window, operand 0']
    #allocation3 [shape = 's32[2]{0}', space=sflag, size = 0x8, scoped, tag = 'scoped memory for tpu_custom_call.1']
    %9 = vsyncpa [#allocation3], 0
    %s10 = scalar_lea.sflag [#allocation3], 1
    %11 = vsyncpa %s10, 0
    loop: start=0, step=1, limit=4
    $region2: #{tpu_custom_call.1} parent=1 // loop_pre_header
      _
    $region3: #{tpu_custom_call.1} parent=1 // loop_header
      %s13 = sphi 0, %s17
      %p14 = scmp.ge.s32.totalorder %s13, 4
      %s20 = sphi 0, %s32
      %s21 = sphi 0, %s28
      %s22 = sphi 0, %s20
      %s23 = sphi 0, %s21
      %s24 = sphi 0, %s22
      %s25 = sphi 0, %s23
      %s33 = sphi 0, %s33
      %s35 = sphi 0, %s33
      %s36 = sphi 0, %s35
      %s50 = sphi 0, %s36
      %s54 = sphi 0, %s54
      %s56 = sphi 0, %s54
      %s57 = sphi 0, %s56
      %s71 = sphi 0, %s57
      %s79 = sphi 0, %s81
      %s82 = sphi 0, %s79
      %s83 = sphi 0, %s82
      %s99 = sphi 0, %s83
      %s107 = sphi 0, %s109
      %s110 = sphi 0, %s107
      %s111 = sphi 0, %s110
      %s127 = sphi 0, %s111
      %s135 = sphi 0, %s137
      %s138 = sphi 0, %s135
      %s139 = sphi 0, %s138
      %s155 = sphi 0, %s139
    $region4: #{tpu_custom_call.1} parent=1 // loop_header_branch
      %16 = sbr.rel (%p14) target = $region8
    $region5: #{tpu_custom_call.1} parent=1 // loop_body
      %s18 = ssub.s32 %s13, 1
      %s19 = ssub.s32 %s13, 2
      %s26 = sadd.s32 1, %s21
      %p27 = scmp.ge.s32.totalorder %s26, 1
      %s28 = scalar_select %p27, 0, %s26
      %s29 = sadd.s32 1, %s20
      %s30 = scalar_select %p27, %s29, %s20
      %p31 = scmp.ge.s32.totalorder %s30, 2
      %s32 = scalar_select %p31, 0, %s30
      %s34 = sadd.s32 %s33, 1
      %p37 = scmp.eq.s32.totalorder %s13, 1
      %p38 = scmp.ne.s32.totalorder %s33, %s35
      %p39 = scmp.eq.s32.totalorder %s13, 0
      %p40 = por %p38, %p39
      %p41 = scmp.ne.s32.totalorder %s33, %s35
      %p42 = scmp.eq.s32.totalorder %s18, 1
      %p43 = por %p41, %p42
      %p44 = scmp.ne.s32.totalorder %s35, %s36
      %p45 = scmp.eq.s32.totalorder %s18, 0
      %p46 = por %p44, %p45
      %p47 = scmp.ne.s32.totalorder %s35, %s36
      %p48 = scmp.eq.s32.totalorder %s19, 1
      %p49 = por %p47, %p48
      %p51 = scmp.ne.s32.totalorder %s36, %s50
      %p52 = scmp.eq.s32.totalorder %s19, 0
      %p53 = por %p51, %p52
      %s55 = sadd.s32 %s54, 1
      %p58 = scmp.eq.s32.totalorder %s13, 1
      %p59 = scmp.ne.s32.totalorder %s54, %s56
      %p60 = scmp.eq.s32.totalorder %s13, 0
      %p61 = por %p59, %p60
      %p62 = scmp.ne.s32.totalorder %s54, %s56
      %p63 = scmp.eq.s32.totalorder %s18, 1
      %p64 = por %p62, %p63
      %p65 = scmp.ne.s32.totalorder %s56, %s57
      %p66 = scmp.eq.s32.totalorder %s18, 0
      %p67 = por %p65, %p66
      %p68 = scmp.ne.s32.totalorder %s56, %s57
      %p69 = scmp.eq.s32.totalorder %s19, 1
      %p70 = por %p68, %p69
      %p72 = scmp.ne.s32.totalorder %s57, %s71
      %p73 = scmp.eq.s32.totalorder %s19, 0
      %p74 = por %p72, %p73
      %s75 = ssub.s32 %s20, %s32
      %s76 = ssub.s32 %s21, %s28
      %s77 = sor.u32 %s75, %s76
      %p78 = scmp.eq.s32.totalorder %s77, 0
      %s80 = sadd.s32 %s79, 1
      %s81 = scalar_select %p78, %s79, %s80
      %p84 = pneg %p78
      %p85 = scmp.eq.s32.totalorder %s13, 1
      %p86 = por %p84, %p85
      %p87 = scmp.ne.s32.totalorder %s79, %s82
      %p88 = scmp.eq.s32.totalorder %s13, 0
      %p89 = por %p87, %p88
      %p90 = scmp.ne.s32.totalorder %s79, %s82
      %p91 = scmp.eq.s32.totalorder %s18, 1
      %p92 = por %p90, %p91
      %p93 = scmp.ne.s32.totalorder %s82, %s83
      %p94 = scmp.eq.s32.totalorder %s18, 0
      %p95 = por %p93, %p94
      %p96 = scmp.ne.s32.totalorder %s82, %s83
      %p97 = scmp.eq.s32.totalorder %s19, 1
      %p98 = por %p96, %p97
      %p100 = scmp.ne.s32.totalorder %s83, %s99
      %p101 = scmp.eq.s32.totalorder %s19, 0
      %p102 = por %p100, %p101
      %s103 = ssub.s32 %s20, %s32
      %s104 = ssub.s32 %s21, %s28
      %s105 = sor.u32 %s103, %s104
      %p106 = scmp.eq.s32.totalorder %s105, 0
      %s108 = sadd.s32 %s107, 1
      %s109 = scalar_select %p106, %s107, %s108
      %p112 = pneg %p106
      %p113 = scmp.eq.s32.totalorder %s13, 1
      %p114 = por %p112, %p113
      %p115 = scmp.ne.s32.totalorder %s107, %s110
      %p116 = scmp.eq.s32.totalorder %s13, 0
      %p117 = por %p115, %p116
      %p118 = scmp.ne.s32.totalorder %s107, %s110
      %p119 = scmp.eq.s32.totalorder %s18, 1
      %p120 = por %p118, %p119
      %p121 = scmp.ne.s32.totalorder %s110, %s111
      %p122 = scmp.eq.s32.totalorder %s18, 0
      %p123 = por %p121, %p122
      %p124 = scmp.ne.s32.totalorder %s110, %s111
      %p125 = scmp.eq.s32.totalorder %s19, 1
      %p126 = por %p124, %p125
      %p128 = scmp.ne.s32.totalorder %s111, %s127
      %p129 = scmp.eq.s32.totalorder %s19, 0
      %p130 = por %p128, %p129
      %s131 = ssub.s32 %s20, %s32
      %s132 = ssub.s32 %s21, %s28
      %s133 = sor.u32 %s131, %s132
      %p134 = scmp.eq.s32.totalorder %s133, 0
      %s136 = sadd.s32 %s135, 1
      %s137 = scalar_select %p134, %s135, %s136
      %p140 = pneg %p134
      %p141 = scmp.eq.s32.totalorder %s13, 1
      %p142 = por %p140, %p141
      %p143 = scmp.ne.s32.totalorder %s135, %s138
      %p144 = scmp.eq.s32.totalorder %s13, 0
      %p145 = por %p143, %p144
      %p146 = scmp.ne.s32.totalorder %s135, %s138
      %p147 = scmp.eq.s32.totalorder %s18, 1
      %p148 = por %p146, %p147
      %p149 = scmp.ne.s32.totalorder %s138, %s139
      %p150 = scmp.eq.s32.totalorder %s18, 0
      %p151 = por %p149, %p150
      %p152 = scmp.ne.s32.totalorder %s138, %s139
      %p153 = scmp.eq.s32.totalorder %s19, 1
      %p154 = por %p152, %p153
      %p156 = scmp.ne.s32.totalorder %s139, %s155
      %p157 = scmp.eq.s32.totalorder %s19, 0
      %p158 = por %p156, %p157
      %p159 = scmp.le.s32.totalorder 1, %s13
      %p160 = scmp.lt.s32.totalorder %s13, 3
      %p161 = pnand %p159, %p160
      %p162 = pneg %p161
      // Predicated region
      $region9: #{tpu_custom_call.1} parent=5 // pred_check
        _
      $region10: #{tpu_custom_call.1} parent=5 // pred_check_branch
        %164 = sbr.rel (%p161) target = $region12
      $region11: #{tpu_custom_call.1} parent=5 // pred_region
        %s165 = ssub.s32 %s13, 1
        // Predicated region
        $region13: #{tpu_custom_call.1} parent=11 // pred_check
          %p166 = pneg %p46
        $region14: #{tpu_custom_call.1} parent=11 // pred_check_branch
          %168 = sbr.rel (%p166) target = $region16
        $region15: #{tpu_custom_call.1} parent=11 // pred_region
          _
        $region16: #{tpu_custom_call.1} parent=11 // pred_fallthru
          _
        // Predicated region
        $region17: #{tpu_custom_call.1} parent=11 // pred_check
          %p169 = pneg %p67
        $region18: #{tpu_custom_call.1} parent=11 // pred_check_branch
          %171 = sbr.rel (%p169) target = $region20
        $region19: #{tpu_custom_call.1} parent=11 // pred_region
          _
        $region20: #{tpu_custom_call.1} parent=11 // pred_fallthru
          _
      $region12: #{tpu_custom_call.1} parent=5 // pred_fallthru
        _
      %p172 = scmp.lt.s32.totalorder %s13, 2
      // Predicated region
      $region21: #{tpu_custom_call.1} parent=5 // pred_check
        %p173 = pneg %p172
      $region22: #{tpu_custom_call.1} parent=5 // pred_check_branch
        %175 = sbr.rel (%p173) target = $region24
      $region23: #{tpu_custom_call.1} parent=5 // pred_region
        // Predicated region
        $region25: #{tpu_custom_call.1} parent=23 // pred_check
          %p176 = pneg %p89
        $region26: #{tpu_custom_call.1} parent=23 // pred_check_branch
          %178 = sbr.rel (%p176) target = $region28
        $region27: #{tpu_custom_call.1} parent=23 // pred_region
          %p179 = scmp.lt.s32.totalorder %s20, 1
          %s180 = scalar_select %p179, %s20, 1
          %p181 = scmp.lt.s32.totalorder %s21, 0
          %s182 = scalar_select %p181, %s21, 0
          %s183 = sadd.s32 %s182, %s180
          %s184 = smul.addr %s183, 4
          %s185 = scalar_lea.vmem %s2, %s184
        $region28: #{tpu_custom_call.1} parent=23 // pred_fallthru
          _
        // Predicated region
        $region29: #{tpu_custom_call.1} parent=23 // pred_check
          %p186 = pneg %p117
        $region30: #{tpu_custom_call.1} parent=23 // pred_check_branch
          %188 = sbr.rel (%p186) target = $region32
        $region31: #{tpu_custom_call.1} parent=23 // pred_region
          %p189 = scmp.lt.s32.totalorder %s20, 1
          %s190 = scalar_select %p189, %s20, 1
          %p191 = scmp.lt.s32.totalorder %s21, 0
          %s192 = scalar_select %p191, %s21, 0
          %s193 = sadd.s32 %s192, %s190
          %s194 = smul.addr %s193, 8
          %s195 = scalar_lea.vmem %s3, %s194
        $region32: #{tpu_custom_call.1} parent=23 // pred_fallthru
          _
      $region24: #{tpu_custom_call.1} parent=5 // pred_fallthru
        _
      %p196 = scmp.le.s32.totalorder 1, %s13
      %p197 = scmp.lt.s32.totalorder %s13, 3
      %p198 = pnand %p196, %p197
      %p199 = pneg %p198
      // Predicated region
      $region33: #{tpu_custom_call.1} parent=5 // pred_check
        _
      $region34: #{tpu_custom_call.1} parent=5 // pred_check_branch
        %201 = sbr.rel (%p198) target = $region36
      $region35: #{tpu_custom_call.1} parent=5 // pred_region
        %s202 = ssub.s32 %s13, 1
        %p203 = pneg %p46
        %p204 = pneg %p43
        %p205 = pneg %p67
        %p206 = pneg %p64
        %p207 = scmp.lt.s32.totalorder %s22, 1
        %s208 = scalar_select %p207, %s22, 1
        %p209 = scmp.lt.s32.totalorder %s23, 0
        %s210 = scalar_select %p209, %s23, 0
        %s211 = sadd.s32 %s210, %s208
        %s212 = smul.addr %s211, 4
        %s213 = scalar_lea.vmem %s2, %s212
        %p214 = pneg %p95
        %p215 = pneg %p92
        %p216 = scmp.lt.s32.totalorder %s22, 1
        %s217 = scalar_select %p216, %s22, 1
        %p218 = scmp.lt.s32.totalorder %s23, 0
        %s219 = scalar_select %p218, %s23, 0
        %s220 = sadd.s32 %s219, %s217
        %s221 = smul.addr %s220, 8
        %s222 = scalar_lea.vmem %s3, %s221
        %p223 = pneg %p123
        %p224 = pneg %p120
        %p225 = pneg %p151
        %p226 = pneg %p148
        %s227 = sand.u32 %s138, 1
        %s228 = scalar_lea.sflag [#allocation3], %s227
        %s229 = sand.u32 %s138, 1
        %s230 = smul.addr %s229, 4
        %s231 = scalar_lea.vmem [#allocation2], %s230
        %p232 = scmp.lt.s32.totalorder %s22, 1
        %s233 = scalar_select %p232, %s22, 1
        %p234 = scmp.lt.s32.totalorder %s23, 0
        %s235 = scalar_select %p234, %s23, 0
        %s236 = sadd.s32 %s235, %s233
        %s237 = smul.addr %s236, 4
        %s238 = scalar_lea.vmem %s2, %s237
        %p239 = scmp.lt.s32.totalorder %s22, 1
        %s240 = scalar_select %p239, %s22, 1
        %p241 = scmp.lt.s32.totalorder %s23, 0
        %s242 = scalar_select %p241, %s23, 0
        %s243 = sadd.s32 %s242, %s240
        %s244 = smul.addr %s243, 8
        %s245 = scalar_lea.vmem %s3, %s244
        %v246 = vld [vmem:[%s0] sm:$0xf]
        %v247 = vld [vmem:[%s1] sm:$0xf]
        %v248 = vld [vmem:[%s245] sm:$0x3f]
        %vm249 = vcmask 48128
        %v251 = vsel %vm249, %v246, 0
        %vm253 = vcmask 1045504
        %v255 = vsel %vm253, %v248, 0
        %257 = vmatpush.msra.mxu0 0.0
        %258 = vmatpush.msra.mxu0 0.0
        %259 = vmatpush.msra.mxu0 0.0
        %260 = vmatpush.msra.mxu0 0.0
        %261 = vmatpush.msra.mxu0 0.0
        %262 = vmatpush.msra.mxu0 0.0
        %263 = vmatpush.msra.mxu0 0.0
        %264 = vmatpush.msra.mxu0 0.0
        %265 = vmatpush.msra.mxu0 0.0
        %266 = vmatpush.msra.mxu0 0.0
        %267 = vmatpush.msra.mxu0 0.0
        %268 = vmatpush.msra.mxu0 0.0
        %269 = vmatpush.msra.mxu0 0.0
        %270 = vmatpush.msra.mxu0 0.0
        %271 = vmatpush.msra.mxu0 0.0
        %272 = vmatpush.msra.mxu0 %v255
        %273 = vmatmul.f32.gmra.mxu0 %v251
        %v274 = vpop.f32.mrf.mxu0
        %v275 = vadd.f32 0.0, %v274
        %276 = vdwg.mxu0
        %v277 = vld [vmem:[%s238] sm:$0xf]
        %v278 = vadd.f32 %v277, %v275
        %280 = vset.pattern.permute.xlu0 0
        %281 = vperm.xlu0 %280, %v247
        %v282 = vpop.permute.xlu0 %281
        %v284 = vadd.f32 %v278, %v282
        %vm285 = vcmask 125952
        %286 = vst.msk [vmem:[%s231] sm:$0xf] %vm285, %v284
        %s287 = sand.u32 %s138, 1
        %s288 = scalar_lea.sflag [#allocation3], %s287
        %s289 = sand.u32 %s138, 1
        %s290 = smul.addr %s289, 4
        %s291 = scalar_lea.vmem [#allocation2], %s290
        // Predicated region
        $region37: #{tpu_custom_call.1} parent=35 // pred_check
          %p292 = pneg %p148
        $region38: #{tpu_custom_call.1} parent=35 // pred_check_branch
          %294 = sbr.rel (%p292) target = $region40
        $region39: #{tpu_custom_call.1} parent=35 // pred_region
          %296 = vsyncadd %s288, 0
          %s297 = sadd.s32 %s23, %s22
          %s298 = smul.addr %s297, 4
          %s299 = scalar_lea.hbm %s4, %s298
          %s301 = sshll.u32 %s291, 4
          %s302 = int_to_ptr.vmem [resolvable:$true] %s301
          %s303 = sshll.u32 %s299, 4
          %s304 = int_to_ptr.hbm [resolvable:$true] %s303
          %306 = dma.vmem_to_hbm [thread:$0]  %s302, 64, %s304, %s288
        $region40: #{tpu_custom_call.1} parent=35 // pred_fallthru
          _
      $region36: #{tpu_custom_call.1} parent=5 // pred_fallthru
        _
      %p307 = scmp.le.s32.totalorder 2, %s13
      // Predicated region
      $region41: #{tpu_custom_call.1} parent=5 // pred_check
        %p308 = pneg %p307
      $region42: #{tpu_custom_call.1} parent=5 // pred_check_branch
        %310 = sbr.rel (%p308) target = $region44
      $region43: #{tpu_custom_call.1} parent=5 // pred_region
        %s311 = ssub.s32 %s13, 2
        // Predicated region
        $region45: #{tpu_custom_call.1} parent=43 // pred_check
          %p312 = pneg %p154
        $region46: #{tpu_custom_call.1} parent=43 // pred_check_branch
          %314 = sbr.rel (%p312) target = $region48
        $region47: #{tpu_custom_call.1} parent=43 // pred_region
          %s315 = sand.u32 %s139, 1
          %s316 = scalar_lea.sflag [#allocation3], %s315
          %s317 = sand.u32 %s139, 1
          %s318 = smul.addr %s317, 4
          %s319 = scalar_lea.vmem [#allocation2], %s318
          %321 = dma.done %s316, 64
        $region48: #{tpu_custom_call.1} parent=43 // pred_fallthru
          _
      $region44: #{tpu_custom_call.1} parent=5 // pred_fallthru
        _
    $region6: #{tpu_custom_call.1} parent=1 // loop_footer
      %s17 = sadd.s32 1, %s13
    $region7: #{tpu_custom_call.1} parent=1 // loop_footer_branch
      %12 = sbr.rel target = $region3
    $region8: #{tpu_custom_call.1} parent=1 // loop_exit
      _
    %322 = vsyncpa [#allocation3], 1
    %s323 = scalar_lea.sflag [#allocation3], 1
    %324 = vsyncpa %s323, 1

</llo_original>
